<compile_context>
chip_gen: v7x
topology: tpu7x:2x2x1
jax: 0.10.0
libtpu: 0.0.40
codegen_flags: <defaults>
</compile_context>

<pallas_src>
import math

import jax
import jax.numpy as jnp
from jax import lax
from jax.experimental import pallas as pl
from jax.experimental.pallas import tpu as pltpu


def _attention_kernel(enc_ref, hidp_ref, w1_ref, v_ref, out_ref):
    # enc_ref : (step, TB, H)  compute dtype (bf16/f32), native layout
    # hidp_ref: (TB, H)        f32, precomputed last_hidden @ W2 + b
    # w1_ref  : (H, H)         compute dtype, resident across grid steps
    # v_ref   : (1, H)         f32, resident
    # out_ref : (step, TB)     f32 attention weights (lane-dense when TB >= 128)
    step = enc_ref.shape[0]
    hidp = hidp_ref[...]
    vvec = v_ref[...]
    w1 = w1_ref[...]

    # Contract H per source position.  `step` is the small, static source
    # length, so an unrolled loop of 2-D (TB, H) @ (H, H) MXU matmuls avoids an
    # in-kernel reshape (not a view -> possible Mosaic relayout/VMEM copy) and
    # an unsupported rank-3 dot_general.  Everything after the MXU stays f32.
    cols = []
    for s in range(step):
        pre = jnp.dot(enc_ref[s], w1, preferred_element_type=jnp.float32)  # (TB, H)
        en = jnp.maximum(pre + hidp, 0.0)                                   # relu
        cols.append(jnp.sum(en * vvec, axis=-1, keepdims=True))             # (TB, 1)
    scores = jnp.concatenate(cols, axis=-1)                                 # (TB, step)

    # Numerically stable softmax over step; exact divide so rows sum to 1.
    m = jnp.max(scores, axis=-1, keepdims=True)
    e = jnp.exp(scores - m)
    probs = e / jnp.sum(e, axis=-1, keepdims=True)

    # One tiny per-tile transpose -> lane-dense (step, TB) store.
    out_ref[...] = jnp.transpose(probs).astype(out_ref.dtype)


def _pick_batch_tile(batch, step, h, itemsize, *, target_bytes=4 << 20):
    """Pick the batch tile TB.

    TB sits in the lane dimension of the (step, TB) output block, so it must be
    a multiple of 128 unless it spans the whole (padded) batch.  Aim for enc
    tiles of ~target_bytes (double-buffered by the pipeline) and leave >= 2
    grid steps for large batches so the "parallel" batch axis can be sharded
    across v7x's two TensorCores.
    """
    row_bytes = max(step * h * itemsize, 1)          # enc bytes per batch row
    if batch * row_bytes <= 2 * target_bytes and batch <= 1024:
        return batch                                 # one tile spans the batch
    cap = max(128, (target_bytes // row_bytes) // 128 * 128)
    half = max(128, (batch // 2) // 128 * 128)       # >= 2 grid steps (megacore)
    tb = min(cap, half)
    for cand in range(tb, 127, -128):                # prefer an exact divisor
        if batch % cand == 0:
            return cand
    # TODO(synk): a huge step*H with a tiny batch would additionally need a
    # step grid axis with an online softmax; out of scope for this module.
    return tb                                        # wrapper pads the batch


def attention_forward(encoder_outputs, last_hidden, W, b, v,
                      *, compute_dtype=jnp.bfloat16):
    """encoder_outputs: (step, batch, H) -- consumed in its NATIVE layout;
    last_hidden: (batch, H); W: (H, 2H) PyTorch Linear weight; b: (H,); v: (H,).
    Returns attention weights of shape (batch, step)."""
    step, batch, H = encoder_outputs.shape

    # Split the Linear(2H -> H): W1 acts on the encoder outputs (streamed by the
    # kernel), W2 on the hidden state (hoisted to one XLA matmul here).
    W1 = W[:, :H].T                                                   # (H, H)
    W2 = W[:, H:].T                                                   # (H, H)
    hid_proj = (jnp.dot(last_hidden, W2, precision=lax.Precision.HIGHEST)
                + b).astype(jnp.float32)                              # (batch, H)
    v2 = v.reshape(1, H).astype(jnp.float32)

    # enc dominates HBM traffic: keep the native (step, batch, H) layout (no
    # wrapper transpose) and stream it (and W1) in bf16 by default.
    enc = encoder_outputs.astype(compute_dtype)
    w1c = W1.astype(compute_dtype)

    TB = _pick_batch_tile(batch, step, H, jnp.dtype(compute_dtype).itemsize)
    pad = (-batch) % TB
    if pad:                                          # rare: batch % TB != 0
        enc = jnp.pad(enc, ((0, 0), (0, pad), (0, 0)))
        hid_proj = jnp.pad(hid_proj, ((0, pad), (0, 0)))
    padded_batch = batch + pad
    grid = (padded_batch // TB,)

    scores_t = pl.pallas_call(
        _attention_kernel,
        out_shape=jax.ShapeDtypeStruct((step, padded_batch), jnp.float32),
        grid_spec=pltpu.PrefetchScalarGridSpec(
            num_scalar_prefetch=0,
            grid=grid,
            in_specs=[
                pl.BlockSpec((step, TB, H), lambda i: (0, i, 0)),  # enc (native)
                pl.BlockSpec((TB, H), lambda i: (i, 0)),           # hid@W2 + b
                pl.BlockSpec((H, H), lambda i: (0, 0)),            # W1 (resident)
                pl.BlockSpec((1, H), lambda i: (0, 0)),            # v  (resident)
            ],
            out_specs=pl.BlockSpec((step, TB), lambda i: (0, i)),  # lane-dense
        ),
        compiler_params=pltpu.CompilerParams(
            dimension_semantics=("parallel",),   # batch axis shards across TCs
            vmem_limit_bytes=32 << 20,           # raises v5e's 16 MiB default
        ),
    )(enc, hid_proj, w1c, v2)

    # Tiny (step, batch) -> (batch, step) transpose; negligible vs enc stream.
    return jnp.transpose(scores_t[:, :batch])


def _reference(encoder_outputs, last_hidden, W, b, v):
    enc = jnp.transpose(encoder_outputs, (1, 0, 2))              # (batch, step, H)
    step = enc.shape[1]
    hid = jnp.repeat(last_hidden[:, None, :], step, axis=1)      # (batch, step, H)
    cat = jnp.concatenate([enc, hid], axis=-1)                   # (batch, step, 2H)
    en = jax.nn.relu(
        jnp.einsum("bsk,hk->bsh", cat, W, precision=lax.Precision.HIGHEST) + b)
    scores = jnp.einsum("h,bsh->bs", v, en, precision=lax.Precision.HIGHEST)
    return jax.nn.softmax(scores, axis=-1)


if __name__ == "__main__":
    hidden, step, batch = 32, 8, 2

    key = jax.random.PRNGKey(0)
    k_enc, k_hid, k_v, k_w, k_b = jax.random.split(key, 5)

    # deterministic parameter init mimicking the PyTorch module's __init__
    stdv = 1.0 / math.sqrt(hidden)
    v = jax.random.uniform(k_v, (hidden,), jnp.float32, -stdv, stdv)
    bound = 1.0 / math.sqrt(2 * hidden)              # Linear(2H, H): fan_in = 2H
    W = jax.random.uniform(k_w, (hidden, 2 * hidden), jnp.float32, -bound, bound)
    b = jax.random.uniform(k_b, (hidden,), jnp.float32, -bound, bound)

    encoder_outputs = jax.random.normal(k_enc, (step, batch, hidden), jnp.float32)
    last_hidden = jax.random.normal(k_hid, (batch, hidden), jnp.float32)

    ref = _reference(encoder_outputs, last_hidden, W, b, v)

    # f32 streams: checks the kernel algebra.  Tolerance covers the TPU's
    # default single-bf16-pass matmul precision inside the kernel.
    out_f32 = attention_forward(encoder_outputs, last_hidden, W, b, v,
                                compute_dtype=jnp.float32)
    out_f32 = jax.block_until_ready(out_f32)
    assert out_f32.shape == (batch, step)
    assert jnp.allclose(out_f32, ref, atol=5e-3, rtol=5e-2), "f32 kernel mismatch"
    assert jnp.allclose(jnp.sum(out_f32, axis=-1), 1.0, atol=1e-5)

    # bf16 enc/W1 streams (the default; halves the dominant HBM stream).
    out_bf16 = attention_forward(encoder_outputs, last_hidden, W, b, v)
    out_bf16 = jax.block_until_ready(out_bf16)
    assert out_bf16.shape == (batch, step)
    assert jnp.allclose(out_bf16, ref, atol=5e-3, rtol=5e-2), "bf16 kernel mismatch"
    assert jnp.allclose(jnp.sum(out_bf16, axis=-1), 1.0, atol=1e-5)

    print("KERNEL_OK")
</pallas_src>

<mosaic_0001>
module attributes {stable_mosaic.version = 11 : i64} {
  func.func @_attention_kernel(%arg0: i32, %arg1: memref<8x2x32xf32, #tpu.memory_space<vmem>>, %arg2: memref<2x32xf32, #tpu.memory_space<vmem>>, %arg3: memref<32x32xf32, #tpu.memory_space<vmem>>, %arg4: memref<1x32xf32, #tpu.memory_space<vmem>>, %arg5: memref<8x2xf32, #tpu.memory_space<vmem>>) attributes {dimension_semantics = [#tpu.dimension_semantics<parallel>], iteration_bounds = array<i64: 1>, scalar_prefetch = 0 : i64, scratch_operands = 0 : i64, tpu.core_type = #tpu.core_type<tc>, window_params = [{transform_indices = @transform_0, window_bounds = array<i64: 8, 2, 32>}, {transform_indices = @transform_1, window_bounds = array<i64: 2, 32>}, {pipeline_mode = #tpu.pipeline_mode<synchronous>, transform_indices = @transform_2, window_bounds = array<i64: 32, 32>}, {pipeline_mode = #tpu.pipeline_mode<synchronous>, transform_indices = @transform_3, window_bounds = array<i64: 1, 32>}, {transform_indices = @transform_4, window_bounds = array<i64: 8, 2>}]} {
    %c0 = arith.constant 0 : index
    %c0_0 = arith.constant 0 : index
    %0 = vector.load %arg2[%c0, %c0_0] : memref<2x32xf32, #tpu.memory_space<vmem>>, vector<2x32xf32>
    %c0_1 = arith.constant 0 : index
    %c0_2 = arith.constant 0 : index
    %1 = vector.load %arg4[%c0_1, %c0_2] : memref<1x32xf32, #tpu.memory_space<vmem>>, vector<1x32xf32>
    %c0_3 = arith.constant 0 : index
    %c0_4 = arith.constant 0 : index
    %2 = vector.load %arg3[%c0_3, %c0_4] : memref<32x32xf32, #tpu.memory_space<vmem>>, vector<32x32xf32>
    %c0_5 = arith.constant 0 : index
    %c0_6 = arith.constant 0 : index
    %c0_7 = arith.constant 0 : index
    %3 = vector.load %arg1[%c0_5, %c0_6, %c0_7] : memref<8x2x32xf32, #tpu.memory_space<vmem>>, vector<1x2x32xf32>
    %4 = vector.shape_cast %3 : vector<1x2x32xf32> to vector<2x32xf32>
    %cst = arith.constant dense<0.000000e+00> : vector<2x32xf32>
    %5 = tpu.matmul %4, %2, %cst {dimension_numbers = #tpu.dot_dimension_numbers<[1], [0], [0], [1], [0, 0, 1, 1], [], []>} : vector<2x32xf32>, vector<32x32xf32>, vector<2x32xf32> -> vector<2x32xf32>
    %6 = arith.addf %5, %0 : vector<2x32xf32>
    %cst_8 = arith.constant 0.000000e+00 : f32
    %7 = vector.broadcast %cst_8 : f32 to vector<2x32xf32>
    %8 = arith.maximumf %6, %7 : vector<2x32xf32>
    %9 = vector.broadcast %1 : vector<1x32xf32> to vector<2x32xf32>
    %10 = arith.mulf %8, %9 : vector<2x32xf32>
    %cst_9 = arith.constant dense<0.000000e+00> : vector<2xf32>
    %11 = vector.multi_reduction <add>, %10, %cst_9 [1] : vector<2x32xf32> to vector<2xf32>
    %12 = vector.shape_cast %11 : vector<2xf32> to vector<2x1xf32>
    %c1 = arith.constant 1 : index
    %c0_10 = arith.constant 0 : index
    %c0_11 = arith.constant 0 : index
    %13 = vector.load %arg1[%c1, %c0_10, %c0_11] : memref<8x2x32xf32, #tpu.memory_space<vmem>>, vector<1x2x32xf32>
    %14 = vector.shape_cast %13 : vector<1x2x32xf32> to vector<2x32xf32>
    %cst_12 = arith.constant dense<0.000000e+00> : vector<2x32xf32>
    %15 = tpu.matmul %14, %2, %cst_12 {dimension_numbers = #tpu.dot_dimension_numbers<[1], [0], [0], [1], [0, 0, 1, 1], [], []>} : vector<2x32xf32>, vector<32x32xf32>, vector<2x32xf32> -> vector<2x32xf32>
    %16 = arith.addf %15, %0 : vector<2x32xf32>
    %cst_13 = arith.constant 0.000000e+00 : f32
    %17 = vector.broadcast %cst_13 : f32 to vector<2x32xf32>
    %18 = arith.maximumf %16, %17 : vector<2x32xf32>
    %19 = vector.broadcast %1 : vector<1x32xf32> to vector<2x32xf32>
    %20 = arith.mulf %18, %19 : vector<2x32xf32>
    %cst_14 = arith.constant dense<0.000000e+00> : vector<2xf32>
    %21 = vector.multi_reduction <add>, %20, %cst_14 [1] : vector<2x32xf32> to vector<2xf32>
    %22 = vector.shape_cast %21 : vector<2xf32> to vector<2x1xf32>
    %c2 = arith.constant 2 : index
    %c0_15 = arith.constant 0 : index
    %c0_16 = arith.constant 0 : index
    %23 = vector.load %arg1[%c2, %c0_15, %c0_16] : memref<8x2x32xf32, #tpu.memory_space<vmem>>, vector<1x2x32xf32>
    %24 = vector.shape_cast %23 : vector<1x2x32xf32> to vector<2x32xf32>
    %cst_17 = arith.constant dense<0.000000e+00> : vector<2x32xf32>
    %25 = tpu.matmul %24, %2, %cst_17 {dimension_numbers = #tpu.dot_dimension_numbers<[1], [0], [0], [1], [0, 0, 1, 1], [], []>} : vector<2x32xf32>, vector<32x32xf32>, vector<2x32xf32> -> vector<2x32xf32>
    %26 = arith.addf %25, %0 : vector<2x32xf32>
    %cst_18 = arith.constant 0.000000e+00 : f32
    %27 = vector.broadcast %cst_18 : f32 to vector<2x32xf32>
    %28 = arith.maximumf %26, %27 : vector<2x32xf32>
    %29 = vector.broadcast %1 : vector<1x32xf32> to vector<2x32xf32>
    %30 = arith.mulf %28, %29 : vector<2x32xf32>
    %cst_19 = arith.constant dense<0.000000e+00> : vector<2xf32>
    %31 = vector.multi_reduction <add>, %30, %cst_19 [1] : vector<2x32xf32> to vector<2xf32>
    %32 = vector.shape_cast %31 : vector<2xf32> to vector<2x1xf32>
    %c3 = arith.constant 3 : index
    %c0_20 = arith.constant 0 : index
    %c0_21 = arith.constant 0 : index
    %33 = vector.load %arg1[%c3, %c0_20, %c0_21] : memref<8x2x32xf32, #tpu.memory_space<vmem>>, vector<1x2x32xf32>
    %34 = vector.shape_cast %33 : vector<1x2x32xf32> to vector<2x32xf32>
    %cst_22 = arith.constant dense<0.000000e+00> : vector<2x32xf32>
    %35 = tpu.matmul %34, %2, %cst_22 {dimension_numbers = #tpu.dot_dimension_numbers<[1], [0], [0], [1], [0, 0, 1, 1], [], []>} : vector<2x32xf32>, vector<32x32xf32>, vector<2x32xf32> -> vector<2x32xf32>
    %36 = arith.addf %35, %0 : vector<2x32xf32>
    %cst_23 = arith.constant 0.000000e+00 : f32
    %37 = vector.broadcast %cst_23 : f32 to vector<2x32xf32>
    %38 = arith.maximumf %36, %37 : vector<2x32xf32>
    %39 = vector.broadcast %1 : vector<1x32xf32> to vector<2x32xf32>
    %40 = arith.mulf %38, %39 : vector<2x32xf32>
    %cst_24 = arith.constant dense<0.000000e+00> : vector<2xf32>
    %41 = vector.multi_reduction <add>, %40, %cst_24 [1] : vector<2x32xf32> to vector<2xf32>
    %42 = vector.shape_cast %41 : vector<2xf32> to vector<2x1xf32>
    %c4 = arith.constant 4 : index
    %c0_25 = arith.constant 0 : index
    %c0_26 = arith.constant 0 : index
    %43 = vector.load %arg1[%c4, %c0_25, %c0_26] : memref<8x2x32xf32, #tpu.memory_space<vmem>>, vector<1x2x32xf32>
    %44 = vector.shape_cast %43 : vector<1x2x32xf32> to vector<2x32xf32>
    %cst_27 = arith.constant dense<0.000000e+00> : vector<2x32xf32>
    %45 = tpu.matmul %44, %2, %cst_27 {dimension_numbers = #tpu.dot_dimension_numbers<[1], [0], [0], [1], [0, 0, 1, 1], [], []>} : vector<2x32xf32>, vector<32x32xf32>, vector<2x32xf32> -> vector<2x32xf32>
    %46 = arith.addf %45, %0 : vector<2x32xf32>
    %cst_28 = arith.constant 0.000000e+00 : f32
    %47 = vector.broadcast %cst_28 : f32 to vector<2x32xf32>
    %48 = arith.maximumf %46, %47 : vector<2x32xf32>
    %49 = vector.broadcast %1 : vector<1x32xf32> to vector<2x32xf32>
    %50 = arith.mulf %48, %49 : vector<2x32xf32>
    %cst_29 = arith.constant dense<0.000000e+00> : vector<2xf32>
    %51 = vector.multi_reduction <add>, %50, %cst_29 [1] : vector<2x32xf32> to vector<2xf32>
    %52 = vector.shape_cast %51 : vector<2xf32> to vector<2x1xf32>
    %c5 = arith.constant 5 : index
    %c0_30 = arith.constant 0 : index
    %c0_31 = arith.constant 0 : index
    %53 = vector.load %arg1[%c5, %c0_30, %c0_31] : memref<8x2x32xf32, #tpu.memory_space<vmem>>, vector<1x2x32xf32>
    %54 = vector.shape_cast %53 : vector<1x2x32xf32> to vector<2x32xf32>
    %cst_32 = arith.constant dense<0.000000e+00> : vector<2x32xf32>
    %55 = tpu.matmul %54, %2, %cst_32 {dimension_numbers = #tpu.dot_dimension_numbers<[1], [0], [0], [1], [0, 0, 1, 1], [], []>} : vector<2x32xf32>, vector<32x32xf32>, vector<2x32xf32> -> vector<2x32xf32>
    %56 = arith.addf %55, %0 : vector<2x32xf32>
    %cst_33 = arith.constant 0.000000e+00 : f32
    %57 = vector.broadcast %cst_33 : f32 to vector<2x32xf32>
    %58 = arith.maximumf %56, %57 : vector<2x32xf32>
    %59 = vector.broadcast %1 : vector<1x32xf32> to vector<2x32xf32>
    %60 = arith.mulf %58, %59 : vector<2x32xf32>
    %cst_34 = arith.constant dense<0.000000e+00> : vector<2xf32>
    %61 = vector.multi_reduction <add>, %60, %cst_34 [1] : vector<2x32xf32> to vector<2xf32>
    %62 = vector.shape_cast %61 : vector<2xf32> to vector<2x1xf32>
    %c6 = arith.constant 6 : index
    %c0_35 = arith.constant 0 : index
    %c0_36 = arith.constant 0 : index
    %63 = vector.load %arg1[%c6, %c0_35, %c0_36] : memref<8x2x32xf32, #tpu.memory_space<vmem>>, vector<1x2x32xf32>
    %64 = vector.shape_cast %63 : vector<1x2x32xf32> to vector<2x32xf32>
    %cst_37 = arith.constant dense<0.000000e+00> : vector<2x32xf32>
    %65 = tpu.matmul %64, %2, %cst_37 {dimension_numbers = #tpu.dot_dimension_numbers<[1], [0], [0], [1], [0, 0, 1, 1], [], []>} : vector<2x32xf32>, vector<32x32xf32>, vector<2x32xf32> -> vector<2x32xf32>
    %66 = arith.addf %65, %0 : vector<2x32xf32>
    %cst_38 = arith.constant 0.000000e+00 : f32
    %67 = vector.broadcast %cst_38 : f32 to vector<2x32xf32>
    %68 = arith.maximumf %66, %67 : vector<2x32xf32>
    %69 = vector.broadcast %1 : vector<1x32xf32> to vector<2x32xf32>
    %70 = arith.mulf %68, %69 : vector<2x32xf32>
    %cst_39 = arith.constant dense<0.000000e+00> : vector<2xf32>
    %71 = vector.multi_reduction <add>, %70, %cst_39 [1] : vector<2x32xf32> to vector<2xf32>
    %72 = vector.shape_cast %71 : vector<2xf32> to vector<2x1xf32>
    %c7 = arith.constant 7 : index
    %c0_40 = arith.constant 0 : index
    %c0_41 = arith.constant 0 : index
    %73 = vector.load %arg1[%c7, %c0_40, %c0_41] : memref<8x2x32xf32, #tpu.memory_space<vmem>>, vector<1x2x32xf32>
    %74 = vector.shape_cast %73 : vector<1x2x32xf32> to vector<2x32xf32>
    %cst_42 = arith.constant dense<0.000000e+00> : vector<2x32xf32>
    %75 = tpu.matmul %74, %2, %cst_42 {dimension_numbers = #tpu.dot_dimension_numbers<[1], [0], [0], [1], [0, 0, 1, 1], [], []>} : vector<2x32xf32>, vector<32x32xf32>, vector<2x32xf32> -> vector<2x32xf32>
    %76 = arith.addf %75, %0 : vector<2x32xf32>
    %cst_43 = arith.constant 0.000000e+00 : f32
    %77 = vector.broadcast %cst_43 : f32 to vector<2x32xf32>
    %78 = arith.maximumf %76, %77 : vector<2x32xf32>
    %79 = vector.broadcast %1 : vector<1x32xf32> to vector<2x32xf32>
    %80 = arith.mulf %78, %79 : vector<2x32xf32>
    %cst_44 = arith.constant dense<0.000000e+00> : vector<2xf32>
    %81 = vector.multi_reduction <add>, %80, %cst_44 [1] : vector<2x32xf32> to vector<2xf32>
    %82 = vector.shape_cast %81 : vector<2xf32> to vector<2x1xf32>
    %83 = tpu.concatenate %12, %22, %32, %42, %52, %62, %72, %82 in 1 : vector<2x1xf32>, vector<2x1xf32>, vector<2x1xf32>, vector<2x1xf32>, vector<2x1xf32>, vector<2x1xf32>, vector<2x1xf32>, vector<2x1xf32> -> vector<2x8xf32>
    %cst_45 = arith.constant dense<0xFF800000> : vector<2xf32>
    %84 = vector.multi_reduction <maximumf>, %83, %cst_45 [1] : vector<2x8xf32> to vector<2xf32>
    %85 = vector.shape_cast %84 : vector<2xf32> to vector<2x1xf32>
    %86 = vector.broadcast %85 : vector<2x1xf32> to vector<2x8xf32>
    %87 = arith.subf %83, %86 : vector<2x8xf32>
    %88 = math.exp %87 : vector<2x8xf32>
    %cst_46 = arith.constant dense<0.000000e+00> : vector<2xf32>
    %89 = vector.multi_reduction <add>, %88, %cst_46 [1] : vector<2x8xf32> to vector<2xf32>
    %90 = vector.shape_cast %89 : vector<2xf32> to vector<2x1xf32>
    %91 = vector.broadcast %90 : vector<2x1xf32> to vector<2x8xf32>
    %92 = arith.divf %88, %91 : vector<2x8xf32>
    %93 = tpu.transpose %92, [1, 0] : vector<2x8xf32> -> vector<8x2xf32>
    %c0_47 = arith.constant 0 : index
    %c0_48 = arith.constant 0 : index
    %94 = vector.load %arg5[%c0_47, %c0_48] : memref<8x2xf32, #tpu.memory_space<vmem>>, vector<8x2xf32>
    tpu.vector_store %arg5[%c0_47, %c0_48], %93 {strides = array<i32>} : memref<8x2xf32, #tpu.memory_space<vmem>>, vector<8x2xf32>,
    return
  }
  func.func @transform_0(%arg0: i32) -> (i32, i32, i32) {
    %c0_i32 = arith.constant 0 : i32
    %c0_i32_0 = arith.constant 0 : i32
    %c0_i32_1 = arith.constant 0 : i32
    return %c0_i32, %arg0, %c0_i32_0 : i32, i32, i32
  }
  func.func @transform_1(%arg0: i32) -> (i32, i32) {
    %c0_i32 = arith.constant 0 : i32
    %c0_i32_0 = arith.constant 0 : i32
    return %arg0, %c0_i32 : i32, i32
  }
  func.func @transform_2(%arg0: i32) -> (i32, i32) {
    %c0_i32 = arith.constant 0 : i32
    %c0_i32_0 = arith.constant 0 : i32
    %c0_i32_1 = arith.constant 0 : i32
    return %c0_i32, %c0_i32_0 : i32, i32
  }
  func.func @transform_3(%arg0: i32) -> (i32, i32) {
    %c0_i32 = arith.constant 0 : i32
    %c0_i32_0 = arith.constant 0 : i32
    %c0_i32_1 = arith.constant 0 : i32
    return %c0_i32, %c0_i32_0 : i32, i32
  }
  func.func @transform_4(%arg0: i32) -> (i32, i32) {
    %c0_i32 = arith.constant 0 : i32
    %c0_i32_0 = arith.constant 0 : i32
    return %c0_i32, %arg0 : i32, i32
  }
}

</mosaic_0001>

<llo_original>
// kernel: tpu_custom_call.1
$region0: #{tpu_custom_call.1}
  #allocation0 [shape = 'u32[]', space=smem, size = 0x4, offset = 0x4, fixed_abs, tag = 'smem constant byte address 0x4 - core index']
  #allocation1 [shape = 'u32[144,128]{1,0:T(1,128)}', space=vmem, size = 0x12000, scoped, tag = 'internal scratch']
  %s0 = inlined_call_operand.hbm [shape: f32[8,2,32], index: 0, kind: input, shape index: {}]
  %s1 = inlined_call_operand.vmem [shape: f32[2,32], index: 1, kind: input, shape index: {}]
  %s2 = inlined_call_operand.hbm [shape: f32[32,32], index: 2, kind: input, shape index: {}]
  %s3 = inlined_call_operand.vmem [shape: f32[1,32], index: 3, kind: input, shape index: {}]
  %s4 = inlined_call_operand.vmem [shape: f32[8,2], index: 4, kind: output, shape index: {}]
  %s5 = sld [smem:[#allocation0]]
  $region34: #{tpu_custom_call.1} parent=0
    _
  %s7 = ssub.s32 1, %s5
  %s8 = scalar_select 0, %s7, %s5
  $region1: #{tpu_custom_call.1} parent=0
    #allocation2 [shape = 'u8[8192]{0}', space=vmem, size = 0x2000, scoped, tag = 'input window, operand 0, single buffered']
    #allocation3 [shape = 's32[1]{0}', space=sflag, size = 0x4, scoped, tag = 'scoped memory for tpu_custom_call.1']
    #allocation4 [shape = 'u8[16384]{0}', space=vmem, size = 0x4000, scoped, tag = 'input window, operand 2, single buffered']
    #allocation5 [shape = 's32[1]{0}', space=sflag, size = 0x4, scoped, tag = 'scoped memory for tpu_custom_call.1']
    %9 = vsyncpa [#allocation3], 0
    %10 = vsyncpa [#allocation5], 0
    // Predicated region
    $region2: #{tpu_custom_call.1} parent=1 // pred_check
      _
    $region3: #{tpu_custom_call.1} parent=1 // pred_check_branch
      %12 = sbr.rel (0) target = $region5
    $region4: #{tpu_custom_call.1} parent=1 // pred_region
      %s14 = ssub.s32 256, 256
      %15 = vsyncadd [#allocation3], %s14
      %s16 = sshll.u32 [#allocation2], 4
      %s17 = int_to_ptr.vmem [resolvable:$true] %s16
      %22 = dma.hbm_to_vmem [thread:$0]  %s0, 256, %s17, [#allocation3], 32, 32, 2
    $region5: #{tpu_custom_call.1} parent=1 // pred_fallthru
      _
    // Predicated region
    $region6: #{tpu_custom_call.1} parent=1 // pred_check
      _
    $region7: #{tpu_custom_call.1} parent=1 // pred_check_branch
      %24 = sbr.rel (0) target = $region9
    $region8: #{tpu_custom_call.1} parent=1 // pred_region
      _
    $region9: #{tpu_custom_call.1} parent=1 // pred_fallthru
      _
    // Predicated region
    $region10: #{tpu_custom_call.1} parent=1 // pred_check
      _
    $region11: #{tpu_custom_call.1} parent=1 // pred_check_branch
      %26 = sbr.rel (0) target = $region13
    $region12: #{tpu_custom_call.1} parent=1 // pred_region
      %s28 = ssub.s32 512, 512
      %29 = vsyncadd [#allocation5], %s28
      %s30 = sshll.u32 [#allocation4], 4
      %s31 = int_to_ptr.vmem [resolvable:$true] %s30
      %36 = dma.hbm_to_vmem [thread:$0]  %s2, 512, %s31, [#allocation5], 128, 128, 8
    $region13: #{tpu_custom_call.1} parent=1 // pred_fallthru
      _
    // Predicated region
    $region14: #{tpu_custom_call.1} parent=1 // pred_check
      _
    $region15: #{tpu_custom_call.1} parent=1 // pred_check_branch
      %38 = sbr.rel (0) target = $region17
    $region16: #{tpu_custom_call.1} parent=1 // pred_region
      _
    $region17: #{tpu_custom_call.1} parent=1 // pred_fallthru
      _
    // Predicated region
    $region18: #{tpu_custom_call.1} parent=1 // pred_check
      _
    $region19: #{tpu_custom_call.1} parent=1 // pred_check_branch
      %40 = sbr.rel (0) target = $region21
    $region20: #{tpu_custom_call.1} parent=1 // pred_region
      %41 = dma.done [#allocation3], 256
    $region21: #{tpu_custom_call.1} parent=1 // pred_fallthru
      _
    // Predicated region
    $region22: #{tpu_custom_call.1} parent=1 // pred_check
      _
    $region23: #{tpu_custom_call.1} parent=1 // pred_check_branch
      %43 = sbr.rel (0) target = $region25
    $region24: #{tpu_custom_call.1} parent=1 // pred_region
      %44 = dma.done [#allocation5], 512
    $region25: #{tpu_custom_call.1} parent=1 // pred_fallthru
      _
    %v45 = vld [vmem:[%s1] sm:$0x3]
    %v46 = vld [vmem:[%s3] sm:$0x1]
    %v47 = vld [vmem:[#allocation4] sm:$0xff]
    %v48 = vld [vmem:[#allocation4 + $0x8] sm:$0xff]
    %v49 = vld [vmem:[#allocation4 + $0x10] sm:$0xff]
    %v50 = vld [vmem:[#allocation4 + $0x18] sm:$0xff]
    %v51 = vld [vmem:[#allocation2] sm:$0x3]
    %vm52 = vcmask 261120
    %v54 = vsel %vm52, %v51, 0
    %56 = vmatprep.subr.mxu0 0.0
    %57 = vmatpush1.msra.mxu0 %v47
    %58 = vmatprep.subr.mxu0 0.0
    %59 = vmatpush1.msra.mxu0 %v48
    %60 = vmatprep.subr.mxu0 0.0
    %61 = vmatpush1.msra.mxu0 %v49
    %62 = vmatprep.subr.mxu0 0.0
    %63 = vmatpush1.msra.mxu0 %v50
    %64 = vmatprep.subr.mxu0 0.0
    %65 = vmatpush1.msra.mxu0 0.0
    %66 = vmatprep.subr.mxu0 0.0
    %67 = vmatpush1.msra.mxu0 0.0
    %68 = vmatprep.subr.mxu0 0.0
    %69 = vmatpush1.msra.mxu0 0.0
    %70 = vmatprep.subr.mxu0 0.0
    %71 = vmatpush1.msra.mxu0 0.0
    %72 = vmatprep.subr.mxu0 0.0
    %73 = vmatpush1.msra.mxu0 0.0
    %74 = vmatprep.subr.mxu0 0.0
    %75 = vmatpush1.msra.mxu0 0.0
    %76 = vmatprep.subr.mxu0 0.0
    %77 = vmatpush1.msra.mxu0 0.0
    %78 = vmatprep.subr.mxu0 0.0
    %79 = vmatpush1.msra.mxu0 0.0
    %80 = vmatprep.subr.mxu0 0.0
    %81 = vmatpush1.msra.mxu0 0.0
    %82 = vmatprep.subr.mxu0 0.0
    %83 = vmatpush1.msra.mxu0 0.0
    %84 = vmatprep.subr.mxu0 0.0
    %85 = vmatpush1.msra.mxu0 0.0
    %86 = vmatprep.subr.mxu0 0.0
    %87 = vmatpush1.msra.mxu0 0.0
    %88 = vmatprep.subr.mxu0 0.0
    %89 = vmatpush1.msra.mxu0 0.0
    %90 = vmatprep.subr.mxu0 0.0
    %91 = vmatpush1.msra.mxu0 0.0
    %92 = vmatprep.subr.mxu0 0.0
    %93 = vmatpush1.msra.mxu0 0.0
    %94 = vmatprep.subr.mxu0 0.0
    %95 = vmatpush1.msra.mxu0 0.0
    %96 = vmatprep.subr.mxu0 0.0
    %97 = vmatpush1.msra.mxu0 0.0
    %98 = vmatprep.subr.mxu0 0.0
    %99 = vmatpush1.msra.mxu0 0.0
    %100 = vmatprep.subr.mxu0 0.0
    %101 = vmatpush1.msra.mxu0 0.0
    %102 = vmatprep.subr.mxu0 0.0
    %103 = vmatpush1.msra.mxu0 0.0
    %104 = vmatprep.subr.mxu0 0.0
    %105 = vmatpush1.msra.mxu0 0.0
    %106 = vmatprep.subr.mxu0 0.0
    %107 = vmatpush1.msra.mxu0 0.0
    %108 = vmatprep.subr.mxu0 0.0
    %109 = vmatpush1.msra.mxu0 0.0
    %110 = vmatprep.subr.mxu0 0.0
    %111 = vmatpush1.msra.mxu0 0.0
    %112 = vmatprep.subr.mxu0 0.0
    %113 = vmatpush1.msra.mxu0 0.0
    %114 = vmatprep.subr.mxu0 0.0
    %115 = vmatpush1.msra.mxu0 0.0
    %116 = vmatprep.subr.mxu0 0.0
    %117 = vmatpush1.msra.mxu0 0.0
    %118 = vmatprep.subr.mxu0 0.0
    %119 = vmatpush1.msra.mxu0 0.0
    %120 = vmatprep.mubr.f32.mxu0 0.0
    %121 = vmatmul.mubr.f32.gmra.mrb[0].mxu0 %v54
    %v122 = vpop.f32.mrb[0].mxu0
    %v123 = vadd.f32 %v45, %v122
    %v124 = vpop.f32.mrb[0].mxu0
    %125 = vdwg.mxu0
    %v126 = vmax.f32 %v123, 0.0
    %v128 = vlaneseq
    %v129 = vshrl.u32 %v128, 7
    %v130 = vsub.s32 0, %v129
    %v131 = vrot.slane %v46, %v130
    %v133 = vmul.f32 %v126, %v131
    %vm134 = vcmask 254976
    %v135 = vsel %vm134, %v133, 0.0
    %136 = vadd.xlane.f32.xlu0 %v135
    %v137 = vpop.xlane.xlu0 %136
    %s138 = scalar_lea.vmem [#allocation2], 2
    %v139 = vld [vmem:[%s138] sm:$0x3]
    %v141 = vsel %vm52, %v139, 0
    %143 = vmatprep.subr.mxu0 0.0
    %144 = vmatpush1.msra.mxu0 %v47
    %145 = vmatprep.subr.mxu0 0.0
    %146 = vmatpush1.msra.mxu0 %v48
    %147 = vmatprep.subr.mxu0 0.0
    %148 = vmatpush1.msra.mxu0 %v49
    %149 = vmatprep.subr.mxu0 0.0
    %150 = vmatpush1.msra.mxu0 %v50
    %151 = vmatprep.subr.mxu0 0.0
    %152 = vmatpush1.msra.mxu0 0.0
    %153 = vmatprep.subr.mxu0 0.0
    %154 = vmatpush1.msra.mxu0 0.0
    %155 = vmatprep.subr.mxu0 0.0
    %156 = vmatpush1.msra.mxu0 0.0
    %157 = vmatprep.subr.mxu0 0.0
    %158 = vmatpush1.msra.mxu0 0.0
    %159 = vmatprep.subr.mxu0 0.0
    %160 = vmatpush1.msra.mxu0 0.0
    %161 = vmatprep.subr.mxu0 0.0
    %162 = vmatpush1.msra.mxu0 0.0
    %163 = vmatprep.subr.mxu0 0.0
    %164 = vmatpush1.msra.mxu0 0.0
    %165 = vmatprep.subr.mxu0 0.0
    %166 = vmatpush1.msra.mxu0 0.0
    %167 = vmatprep.subr.mxu0 0.0
    %168 = vmatpush1.msra.mxu0 0.0
    %169 = vmatprep.subr.mxu0 0.0
    %170 = vmatpush1.msra.mxu0 0.0
    %171 = vmatprep.subr.mxu0 0.0
    %172 = vmatpush1.msra.mxu0 0.0
    %173 = vmatprep.subr.mxu0 0.0
    %174 = vmatpush1.msra.mxu0 0.0
    %175 = vmatprep.subr.mxu0 0.0
    %176 = vmatpush1.msra.mxu0 0.0
    %177 = vmatprep.subr.mxu0 0.0
    %178 = vmatpush1.msra.mxu0 0.0
    %179 = vmatprep.subr.mxu0 0.0
    %180 = vmatpush1.msra.mxu0 0.0
    %181 = vmatprep.subr.mxu0 0.0
    %182 = vmatpush1.msra.mxu0 0.0
    %183 = vmatprep.subr.mxu0 0.0
    %184 = vmatpush1.msra.mxu0 0.0
    %185 = vmatprep.subr.mxu0 0.0
    %186 = vmatpush1.msra.mxu0 0.0
    %187 = vmatprep.subr.mxu0 0.0
    %188 = vmatpush1.msra.mxu0 0.0
    %189 = vmatprep.subr.mxu0 0.0
    %190 = vmatpush1.msra.mxu0 0.0
    %191 = vmatprep.subr.mxu0 0.0
    %192 = vmatpush1.msra.mxu0 0.0
    %193 = vmatprep.subr.mxu0 0.0
    %194 = vmatpush1.msra.mxu0 0.0
    %195 = vmatprep.subr.mxu0 0.0
    %196 = vmatpush1.msra.mxu0 0.0
    %197 = vmatprep.subr.mxu0 0.0
    %198 = vmatpush1.msra.mxu0 0.0
    %199 = vmatprep.subr.mxu0 0.0
    %200 = vmatpush1.msra.mxu0 0.0
    %201 = vmatprep.subr.mxu0 0.0
    %202 = vmatpush1.msra.mxu0 0.0
    %203 = vmatprep.subr.mxu0 0.0
    %204 = vmatpush1.msra.mxu0 0.0
    %205 = vmatprep.subr.mxu0 0.0
    %206 = vmatpush1.msra.mxu0 0.0
    %207 = vmatprep.mubr.f32.mxu0 0.0
    %208 = vmatmul.mubr.f32.gmra.mrb[0].mxu0 %v141
    %v209 = vpop.f32.mrb[0].mxu0
    %v210 = vadd.f32 %v45, %v209
    %v211 = vpop.f32.mrb[0].mxu0
    %212 = vdwg.mxu0
    %v213 = vmax.f32 %v210, 0.0
    %v214 = vmul.f32 %v213, %v131
    %v215 = vsel %vm134, %v214, 0.0
    %216 = vadd.xlane.f32.xlu0 %v215
    %v217 = vpop.xlane.xlu0 %216
    %s218 = scalar_lea.vmem [#allocation2], 4
    %v219 = vld [vmem:[%s218] sm:$0x3]
    %v221 = vsel %vm52, %v219, 0
    %223 = vmatprep.subr.mxu0 0.0
    %224 = vmatpush1.msra.mxu0 %v47
    %225 = vmatprep.subr.mxu0 0.0
    %226 = vmatpush1.msra.mxu0 %v48
    %227 = vmatprep.subr.mxu0 0.0
    %228 = vmatpush1.msra.mxu0 %v49
    %229 = vmatprep.subr.mxu0 0.0
    %230 = vmatpush1.msra.mxu0 %v50
    %231 = vmatprep.subr.mxu0 0.0
    %232 = vmatpush1.msra.mxu0 0.0
    %233 = vmatprep.subr.mxu0 0.0
    %234 = vmatpush1.msra.mxu0 0.0
    %235 = vmatprep.subr.mxu0 0.0
    %236 = vmatpush1.msra.mxu0 0.0
    %237 = vmatprep.subr.mxu0 0.0
    %238 = vmatpush1.msra.mxu0 0.0
    %239 = vmatprep.subr.mxu0 0.0
    %240 = vmatpush1.msra.mxu0 0.0
    %241 = vmatprep.subr.mxu0 0.0
    %242 = vmatpush1.msra.mxu0 0.0
    %243 = vmatprep.subr.mxu0 0.0
    %244 = vmatpush1.msra.mxu0 0.0
    %245 = vmatprep.subr.mxu0 0.0
    %246 = vmatpush1.msra.mxu0 0.0
    %247 = vmatprep.subr.mxu0 0.0
    %248 = vmatpush1.msra.mxu0 0.0
    %249 = vmatprep.subr.mxu0 0.0
    %250 = vmatpush1.msra.mxu0 0.0
    %251 = vmatprep.subr.mxu0 0.0
    %252 = vmatpush1.msra.mxu0 0.0
    %253 = vmatprep.subr.mxu0 0.0
    %254 = vmatpush1.msra.mxu0 0.0
    %255 = vmatprep.subr.mxu0 0.0
    %256 = vmatpush1.msra.mxu0 0.0
    %257 = vmatprep.subr.mxu0 0.0
    %258 = vmatpush1.msra.mxu0 0.0
    %259 = vmatprep.subr.mxu0 0.0
    %260 = vmatpush1.msra.mxu0 0.0
    %261 = vmatprep.subr.mxu0 0.0
    %262 = vmatpush1.msra.mxu0 0.0
    %263 = vmatprep.subr.mxu0 0.0
    %264 = vmatpush1.msra.mxu0 0.0
    %265 = vmatprep.subr.mxu0 0.0
    %266 = vmatpush1.msra.mxu0 0.0
    %267 = vmatprep.subr.mxu0 0.0
    %268 = vmatpush1.msra.mxu0 0.0
    %269 = vmatprep.subr.mxu0 0.0
    %270 = vmatpush1.msra.mxu0 0.0
    %271 = vmatprep.subr.mxu0 0.0
    %272 = vmatpush1.msra.mxu0 0.0
    %273 = vmatprep.subr.mxu0 0.0
    %274 = vmatpush1.msra.mxu0 0.0
    %275 = vmatprep.subr.mxu0 0.0
    %276 = vmatpush1.msra.mxu0 0.0
    %277 = vmatprep.subr.mxu0 0.0
    %278 = vmatpush1.msra.mxu0 0.0
    %279 = vmatprep.subr.mxu0 0.0
    %280 = vmatpush1.msra.mxu0 0.0
    %281 = vmatprep.subr.mxu0 0.0
    %282 = vmatpush1.msra.mxu0 0.0
    %283 = vmatprep.subr.mxu0 0.0
    %284 = vmatpush1.msra.mxu0 0.0
    %285 = vmatprep.subr.mxu0 0.0
    %286 = vmatpush1.msra.mxu0 0.0
    %287 = vmatprep.mubr.f32.mxu0 0.0
    %288 = vmatmul.mubr.f32.gmra.mrb[0].mxu0 %v221
    %v289 = vpop.f32.mrb[0].mxu0
    %v290 = vadd.f32 %v45, %v289
    %v291 = vpop.f32.mrb[0].mxu0
    %292 = vdwg.mxu0
    %v293 = vmax.f32 %v290, 0.0
    %v294 = vmul.f32 %v293, %v131
    %v295 = vsel %vm134, %v294, 0.0
    %296 = vadd.xlane.f32.xlu0 %v295
    %v297 = vpop.xlane.xlu0 %296
    %s298 = scalar_lea.vmem [#allocation2], 6
    %v299 = vld [vmem:[%s298] sm:$0x3]
    %v301 = vsel %vm52, %v299, 0
    %303 = vmatprep.subr.mxu0 0.0
    %304 = vmatpush1.msra.mxu0 %v47
    %305 = vmatprep.subr.mxu0 0.0
    %306 = vmatpush1.msra.mxu0 %v48
    %307 = vmatprep.subr.mxu0 0.0
    %308 = vmatpush1.msra.mxu0 %v49
    %309 = vmatprep.subr.mxu0 0.0
    %310 = vmatpush1.msra.mxu0 %v50
    %311 = vmatprep.subr.mxu0 0.0
    %312 = vmatpush1.msra.mxu0 0.0
    %313 = vmatprep.subr.mxu0 0.0
    %314 = vmatpush1.msra.mxu0 0.0
    %315 = vmatprep.subr.mxu0 0.0
    %316 = vmatpush1.msra.mxu0 0.0
    %317 = vmatprep.subr.mxu0 0.0
    %318 = vmatpush1.msra.mxu0 0.0
    %319 = vmatprep.subr.mxu0 0.0
    %320 = vmatpush1.msra.mxu0 0.0
    %321 = vmatprep.subr.mxu0 0.0
    %322 = vmatpush1.msra.mxu0 0.0
    %323 = vmatprep.subr.mxu0 0.0
    %324 = vmatpush1.msra.mxu0 0.0
    %325 = vmatprep.subr.mxu0 0.0
    %326 = vmatpush1.msra.mxu0 0.0
    %327 = vmatprep.subr.mxu0 0.0
    %328 = vmatpush1.msra.mxu0 0.0
    %329 = vmatprep.subr.mxu0 0.0
    %330 = vmatpush1.msra.mxu0 0.0
    %331 = vmatprep.subr.mxu0 0.0
    %332 = vmatpush1.msra.mxu0 0.0
    %333 = vmatprep.subr.mxu0 0.0
    %334 = vmatpush1.msra.mxu0 0.0
    %335 = vmatprep.subr.mxu0 0.0
    %336 = vmatpush1.msra.mxu0 0.0
    %337 = vmatprep.subr.mxu0 0.0
    %338 = vmatpush1.msra.mxu0 0.0
    %339 = vmatprep.subr.mxu0 0.0
    %340 = vmatpush1.msra.mxu0 0.0
    %341 = vmatprep.subr.mxu0 0.0
    %342 = vmatpush1.msra.mxu0 0.0
    %343 = vmatprep.subr.mxu0 0.0
    %344 = vmatpush1.msra.mxu0 0.0
    %345 = vmatprep.subr.mxu0 0.0
    %346 = vmatpush1.msra.mxu0 0.0
    %347 = vmatprep.subr.mxu0 0.0
    %348 = vmatpush1.msra.mxu0 0.0
    %349 = vmatprep.subr.mxu0 0.0
    %350 = vmatpush1.msra.mxu0 0.0
    %351 = vmatprep.subr.mxu0 0.0
    %352 = vmatpush1.msra.mxu0 0.0
    %353 = vmatprep.subr.mxu0 0.0
    %354 = vmatpush1.msra.mxu0 0.0
    %355 = vmatprep.subr.mxu0 0.0
    %356 = vmatpush1.msra.mxu0 0.0
    %357 = vmatprep.subr.mxu0 0.0
    %358 = vmatpush1.msra.mxu0 0.0
    %359 = vmatprep.subr.mxu0 0.0
    %360 = vmatpush1.msra.mxu0 0.0
    %361 = vmatprep.subr.mxu0 0.0
    %362 = vmatpush1.msra.mxu0 0.0
    %363 = vmatprep.subr.mxu0 0.0
    %364 = vmatpush1.msra.mxu0 0.0
    %365 = vmatprep.subr.mxu0 0.0
    %366 = vmatpush1.msra.mxu0 0.0
    %367 = vmatprep.mubr.f32.mxu0 0.0
    %368 = vmatmul.mubr.f32.gmra.mrb[0].mxu0 %v301
    %v369 = vpop.f32.mrb[0].mxu0
    %v370 = vadd.f32 %v45, %v369
    %v371 = vpop.f32.mrb[0].mxu0
    %372 = vdwg.mxu0
    %v373 = vmax.f32 %v370, 0.0
    %v374 = vmul.f32 %v373, %v131
    %v375 = vsel %vm134, %v374, 0.0
    %376 = vadd.xlane.f32.xlu0 %v375
    %v377 = vpop.xlane.xlu0 %376
    %s378 = scalar_lea.vmem [#allocation2], 8
    %v379 = vld [vmem:[%s378] sm:$0x3]
    %v381 = vsel %vm52, %v379, 0
    %383 = vmatprep.subr.mxu0 0.0
    %384 = vmatpush1.msra.mxu0 %v47
    %385 = vmatprep.subr.mxu0 0.0
    %386 = vmatpush1.msra.mxu0 %v48
    %387 = vmatprep.subr.mxu0 0.0
    %388 = vmatpush1.msra.mxu0 %v49
    %389 = vmatprep.subr.mxu0 0.0
    %390 = vmatpush1.msra.mxu0 %v50
    %391 = vmatprep.subr.mxu0 0.0
    %392 = vmatpush1.msra.mxu0 0.0
    %393 = vmatprep.subr.mxu0 0.0
    %394 = vmatpush1.msra.mxu0 0.0
    %395 = vmatprep.subr.mxu0 0.0
    %396 = vmatpush1.msra.mxu0 0.0
    %397 = vmatprep.subr.mxu0 0.0
    %398 = vmatpush1.msra.mxu0 0.0
    %399 = vmatprep.subr.mxu0 0.0
    %400 = vmatpush1.msra.mxu0 0.0
    %401 = vmatprep.subr.mxu0 0.0
    %402 = vmatpush1.msra.mxu0 0.0
    %403 = vmatprep.subr.mxu0 0.0
    %404 = vmatpush1.msra.mxu0 0.0
    %405 = vmatprep.subr.mxu0 0.0
    %406 = vmatpush1.msra.mxu0 0.0
    %407 = vmatprep.subr.mxu0 0.0
    %408 = vmatpush1.msra.mxu0 0.0
    %409 = vmatprep.subr.mxu0 0.0
    %410 = vmatpush1.msra.mxu0 0.0
    %411 = vmatprep.subr.mxu0 0.0
    %412 = vmatpush1.msra.mxu0 0.0
    %413 = vmatprep.subr.mxu0 0.0
    %414 = vmatpush1.msra.mxu0 0.0
    %415 = vmatprep.subr.mxu0 0.0
    %416 = vmatpush1.msra.mxu0 0.0
    %417 = vmatprep.subr.mxu0 0.0
    %418 = vmatpush1.msra.mxu0 0.0
    %419 = vmatprep.subr.mxu0 0.0
    %420 = vmatpush1.msra.mxu0 0.0
    %421 = vmatprep.subr.mxu0 0.0
    %422 = vmatpush1.msra.mxu0 0.0
    %423 = vmatprep.subr.mxu0 0.0
    %424 = vmatpush1.msra.mxu0 0.0
    %425 = vmatprep.subr.mxu0 0.0
    %426 = vmatpush1.msra.mxu0 0.0
    %427 = vmatprep.subr.mxu0 0.0
    %428 = vmatpush1.msra.mxu0 0.0
    %429 = vmatprep.subr.mxu0 0.0
    %430 = vmatpush1.msra.mxu0 0.0
    %431 = vmatprep.subr.mxu0 0.0
    %432 = vmatpush1.msra.mxu0 0.0
    %433 = vmatprep.subr.mxu0 0.0
    %434 = vmatpush1.msra.mxu0 0.0
    %435 = vmatprep.subr.mxu0 0.0
    %436 = vmatpush1.msra.mxu0 0.0
    %437 = vmatprep.subr.mxu0 0.0
    %438 = vmatpush1.msra.mxu0 0.0
    %439 = vmatprep.subr.mxu0 0.0
    %440 = vmatpush1.msra.mxu0 0.0
    %441 = vmatprep.subr.mxu0 0.0
    %442 = vmatpush1.msra.mxu0 0.0
    %443 = vmatprep.subr.mxu0 0.0
    %444 = vmatpush1.msra.mxu0 0.0
    %445 = vmatprep.subr.mxu0 0.0
    %446 = vmatpush1.msra.mxu0 0.0
    %447 = vmatprep.mubr.f32.mxu0 0.0
    %448 = vmatmul.mubr.f32.gmra.mrb[0].mxu0 %v381
    %v449 = vpop.f32.mrb[0].mxu0
    %v450 = vadd.f32 %v45, %v449
    %v451 = vpop.f32.mrb[0].mxu0
    %452 = vdwg.mxu0
    %v453 = vmax.f32 %v450, 0.0
    %v454 = vmul.f32 %v453, %v131
    %v455 = vsel %vm134, %v454, 0.0
    %456 = vadd.xlane.f32.xlu0 %v455
    %v457 = vpop.xlane.xlu0 %456
    %s458 = scalar_lea.vmem [#allocation2], 10
    %v459 = vld [vmem:[%s458] sm:$0x3]
    %v461 = vsel %vm52, %v459, 0
    %463 = vmatprep.subr.mxu0 0.0
    %464 = vmatpush1.msra.mxu0 %v47
    %465 = vmatprep.subr.mxu0 0.0
    %466 = vmatpush1.msra.mxu0 %v48
    %467 = vmatprep.subr.mxu0 0.0
    %468 = vmatpush1.msra.mxu0 %v49
    %469 = vmatprep.subr.mxu0 0.0
    %470 = vmatpush1.msra.mxu0 %v50
    %471 = vmatprep.subr.mxu0 0.0
    %472 = vmatpush1.msra.mxu0 0.0
    %473 = vmatprep.subr.mxu0 0.0
    %474 = vmatpush1.msra.mxu0 0.0
    %475 = vmatprep.subr.mxu0 0.0
    %476 = vmatpush1.msra.mxu0 0.0
    %477 = vmatprep.subr.mxu0 0.0
    %478 = vmatpush1.msra.mxu0 0.0
    %479 = vmatprep.subr.mxu0 0.0
    %480 = vmatpush1.msra.mxu0 0.0
    %481 = vmatprep.subr.mxu0 0.0
    %482 = vmatpush1.msra.mxu0 0.0
    %483 = vmatprep.subr.mxu0 0.0
    %484 = vmatpush1.msra.mxu0 0.0
    %485 = vmatprep.subr.mxu0 0.0
    %486 = vmatpush1.msra.mxu0 0.0
    %487 = vmatprep.subr.mxu0 0.0
    %488 = vmatpush1.msra.mxu0 0.0
    %489 = vmatprep.subr.mxu0 0.0
    %490 = vmatpush1.msra.mxu0 0.0
    %491 = vmatprep.subr.mxu0 0.0
    %492 = vmatpush1.msra.mxu0 0.0
    %493 = vmatprep.subr.mxu0 0.0
    %494 = vmatpush1.msra.mxu0 0.0
    %495 = vmatprep.subr.mxu0 0.0
    %496 = vmatpush1.msra.mxu0 0.0
    %497 = vmatprep.subr.mxu0 0.0
    %498 = vmatpush1.msra.mxu0 0.0
    %499 = vmatprep.subr.mxu0 0.0
    %500 = vmatpush1.msra.mxu0 0.0
    %501 = vmatprep.subr.mxu0 0.0
    %502 = vmatpush1.msra.mxu0 0.0
    %503 = vmatprep.subr.mxu0 0.0
    %504 = vmatpush1.msra.mxu0 0.0
    %505 = vmatprep.subr.mxu0 0.0
    %506 = vmatpush1.msra.mxu0 0.0
    %507 = vmatprep.subr.mxu0 0.0
    %508 = vmatpush1.msra.mxu0 0.0
    %509 = vmatprep.subr.mxu0 0.0
    %510 = vmatpush1.msra.mxu0 0.0
    %511 = vmatprep.subr.mxu0 0.0
    %512 = vmatpush1.msra.mxu0 0.0
    %513 = vmatprep.subr.mxu0 0.0
    %514 = vmatpush1.msra.mxu0 0.0
    %515 = vmatprep.subr.mxu0 0.0
    %516 = vmatpush1.msra.mxu0 0.0
    %517 = vmatprep.subr.mxu0 0.0
    %518 = vmatpush1.msra.mxu0 0.0
    %519 = vmatprep.subr.mxu0 0.0
    %520 = vmatpush1.msra.mxu0 0.0
    %521 = vmatprep.subr.mxu0 0.0
    %522 = vmatpush1.msra.mxu0 0.0
    %523 = vmatprep.subr.mxu0 0.0
    %524 = vmatpush1.msra.mxu0 0.0
    %525 = vmatprep.subr.mxu0 0.0
    %526 = vmatpush1.msra.mxu0 0.0
    %527 = vmatprep.mubr.f32.mxu0 0.0
    %528 = vmatmul.mubr.f32.gmra.mrb[0].mxu0 %v461
    %v529 = vpop.f32.mrb[0].mxu0
    %v530 = vadd.f32 %v45, %v529
    %v531 = vpop.f32.mrb[0].mxu0
    %532 = vdwg.mxu0
    %v533 = vmax.f32 %v530, 0.0
    %v534 = vmul.f32 %v533, %v131
    %v535 = vsel %vm134, %v534, 0.0
    %536 = vadd.xlane.f32.xlu0 %v535
    %v537 = vpop.xlane.xlu0 %536
    %s538 = scalar_lea.vmem [#allocation2], 12
    %v539 = vld [vmem:[%s538] sm:$0x3]
    %v541 = vsel %vm52, %v539, 0
    %543 = vmatprep.subr.mxu0 0.0
    %544 = vmatpush1.msra.mxu0 %v47
    %545 = vmatprep.subr.mxu0 0.0
    %546 = vmatpush1.msra.mxu0 %v48
    %547 = vmatprep.subr.mxu0 0.0
    %548 = vmatpush1.msra.mxu0 %v49
    %549 = vmatprep.subr.mxu0 0.0
    %550 = vmatpush1.msra.mxu0 %v50
    %551 = vmatprep.subr.mxu0 0.0
    %552 = vmatpush1.msra.mxu0 0.0
    %553 = vmatprep.subr.mxu0 0.0
    %554 = vmatpush1.msra.mxu0 0.0
    %555 = vmatprep.subr.mxu0 0.0
    %556 = vmatpush1.msra.mxu0 0.0
    %557 = vmatprep.subr.mxu0 0.0
    %558 = vmatpush1.msra.mxu0 0.0
    %559 = vmatprep.subr.mxu0 0.0
    %560 = vmatpush1.msra.mxu0 0.0
    %561 = vmatprep.subr.mxu0 0.0
    %562 = vmatpush1.msra.mxu0 0.0
    %563 = vmatprep.subr.mxu0 0.0
    %564 = vmatpush1.msra.mxu0 0.0
    %565 = vmatprep.subr.mxu0 0.0
    %566 = vmatpush1.msra.mxu0 0.0
    %567 = vmatprep.subr.mxu0 0.0
    %568 = vmatpush1.msra.mxu0 0.0
    %569 = vmatprep.subr.mxu0 0.0
    %570 = vmatpush1.msra.mxu0 0.0
    %571 = vmatprep.subr.mxu0 0.0
    %572 = vmatpush1.msra.mxu0 0.0
    %573 = vmatprep.subr.mxu0 0.0
    %574 = vmatpush1.msra.mxu0 0.0
    %575 = vmatprep.subr.mxu0 0.0
    %576 = vmatpush1.msra.mxu0 0.0
    %577 = vmatprep.subr.mxu0 0.0
    %578 = vmatpush1.msra.mxu0 0.0
    %579 = vmatprep.subr.mxu0 0.0
    %580 = vmatpush1.msra.mxu0 0.0
    %581 = vmatprep.subr.mxu0 0.0
    %582 = vmatpush1.msra.mxu0 0.0
    %583 = vmatprep.subr.mxu0 0.0
    %584 = vmatpush1.msra.mxu0 0.0
    %585 = vmatprep.subr.mxu0 0.0
    %586 = vmatpush1.msra.mxu0 0.0
    %587 = vmatprep.subr.mxu0 0.0
    %588 = vmatpush1.msra.mxu0 0.0
    %589 = vmatprep.subr.mxu0 0.0
    %590 = vmatpush1.msra.mxu0 0.0
    %591 = vmatprep.subr.mxu0 0.0
    %592 = vmatpush1.msra.mxu0 0.0
    %593 = vmatprep.subr.mxu0 0.0
    %594 = vmatpush1.msra.mxu0 0.0
    %595 = vmatprep.subr.mxu0 0.0
    %596 = vmatpush1.msra.mxu0 0.0
    %597 = vmatprep.subr.mxu0 0.0
    %598 = vmatpush1.msra.mxu0 0.0
    %599 = vmatprep.subr.mxu0 0.0
    %600 = vmatpush1.msra.mxu0 0.0
    %601 = vmatprep.subr.mxu0 0.0
    %602 = vmatpush1.msra.mxu0 0.0
    %603 = vmatprep.subr.mxu0 0.0
    %604 = vmatpush1.msra.mxu0 0.0
    %605 = vmatprep.subr.mxu0 0.0
    %606 = vmatpush1.msra.mxu0 0.0
    %607 = vmatprep.mubr.f32.mxu0 0.0
    %608 = vmatmul.mubr.f32.gmra.mrb[0].mxu0 %v541
    %v609 = vpop.f32.mrb[0].mxu0
    %v610 = vadd.f32 %v45, %v609
    %v611 = vpop.f32.mrb[0].mxu0
    %612 = vdwg.mxu0
    %v613 = vmax.f32 %v610, 0.0
    %v614 = vmul.f32 %v613, %v131
    %v615 = vsel %vm134, %v614, 0.0
    %616 = vadd.xlane.f32.xlu0 %v615
    %v617 = vpop.xlane.xlu0 %616
    %s618 = scalar_lea.vmem [#allocation2], 14
    %v619 = vld [vmem:[%s618] sm:$0x3]
    %v621 = vsel %vm52, %v619, 0
    %623 = vmatprep.subr.mxu0 0.0
    %624 = vmatpush1.msra.mxu0 %v47
    %625 = vmatprep.subr.mxu0 0.0
    %626 = vmatpush1.msra.mxu0 %v48
    %627 = vmatprep.subr.mxu0 0.0
    %628 = vmatpush1.msra.mxu0 %v49
    %629 = vmatprep.subr.mxu0 0.0
    %630 = vmatpush1.msra.mxu0 %v50
    %631 = vmatprep.subr.mxu0 0.0
    %632 = vmatpush1.msra.mxu0 0.0
    %633 = vmatprep.subr.mxu0 0.0
    %634 = vmatpush1.msra.mxu0 0.0
    %635 = vmatprep.subr.mxu0 0.0
    %636 = vmatpush1.msra.mxu0 0.0
    %637 = vmatprep.subr.mxu0 0.0
    %638 = vmatpush1.msra.mxu0 0.0
    %639 = vmatprep.subr.mxu0 0.0
    %640 = vmatpush1.msra.mxu0 0.0
    %641 = vmatprep.subr.mxu0 0.0
    %642 = vmatpush1.msra.mxu0 0.0
    %643 = vmatprep.subr.mxu0 0.0
    %644 = vmatpush1.msra.mxu0 0.0
    %645 = vmatprep.subr.mxu0 0.0
    %646 = vmatpush1.msra.mxu0 0.0
    %647 = vmatprep.subr.mxu0 0.0
    %648 = vmatpush1.msra.mxu0 0.0
    %649 = vmatprep.subr.mxu0 0.0
    %650 = vmatpush1.msra.mxu0 0.0
    %651 = vmatprep.subr.mxu0 0.0
    %652 = vmatpush1.msra.mxu0 0.0
    %653 = vmatprep.subr.mxu0 0.0
    %654 = vmatpush1.msra.mxu0 0.0
    %655 = vmatprep.subr.mxu0 0.0
    %656 = vmatpush1.msra.mxu0 0.0
    %657 = vmatprep.subr.mxu0 0.0
    %658 = vmatpush1.msra.mxu0 0.0
    %659 = vmatprep.subr.mxu0 0.0
    %660 = vmatpush1.msra.mxu0 0.0
    %661 = vmatprep.subr.mxu0 0.0
    %662 = vmatpush1.msra.mxu0 0.0
    %663 = vmatprep.subr.mxu0 0.0
    %664 = vmatpush1.msra.mxu0 0.0
    %665 = vmatprep.subr.mxu0 0.0
    %666 = vmatpush1.msra.mxu0 0.0
    %667 = vmatprep.subr.mxu0 0.0
    %668 = vmatpush1.msra.mxu0 0.0
    %669 = vmatprep.subr.mxu0 0.0
    %670 = vmatpush1.msra.mxu0 0.0
    %671 = vmatprep.subr.mxu0 0.0
    %672 = vmatpush1.msra.mxu0 0.0
    %673 = vmatprep.subr.mxu0 0.0
    %674 = vmatpush1.msra.mxu0 0.0
    %675 = vmatprep.subr.mxu0 0.0
    %676 = vmatpush1.msra.mxu0 0.0
    %677 = vmatprep.subr.mxu0 0.0
    %678 = vmatpush1.msra.mxu0 0.0
    %679 = vmatprep.subr.mxu0 0.0
    %680 = vmatpush1.msra.mxu0 0.0
    %681 = vmatprep.subr.mxu0 0.0
    %682 = vmatpush1.msra.mxu0 0.0
    %683 = vmatprep.subr.mxu0 0.0
    %684 = vmatpush1.msra.mxu0 0.0
    %685 = vmatprep.subr.mxu0 0.0
    %686 = vmatpush1.msra.mxu0 0.0
    %687 = vmatprep.mubr.f32.mxu0 0.0
    %688 = vmatmul.mubr.f32.gmra.mrb[0].mxu0 %v621
    %v689 = vpop.f32.mrb[0].mxu0
    %v690 = vadd.f32 %v45, %v689
    %v691 = vpop.f32.mrb[0].mxu0
    %692 = vdwg.mxu0
    %v693 = vmax.f32 %v690, 0.0
    %v694 = vmul.f32 %v693, %v131
    %v695 = vsel %vm134, %v694, 0.0
    %696 = vadd.xlane.f32.xlu0 %v695
    %v697 = vpop.xlane.xlu0 %696
    %vm698 = vcmask 7168
    %v699 = vsel %vm698, %v137, %v217
    %vm700 = vcmask 15360
    %v701 = vsel %vm700, %v699, %v297
    %vm702 = vcmask 23552
    %v703 = vsel %vm702, %v701, %v377
    %vm704 = vcmask 31744
    %v705 = vsel %vm704, %v703, %v457
    %vm706 = vcmask 39936
    %v707 = vsel %vm706, %v705, %v537
    %vm708 = vcmask 48128
    %v709 = vsel %vm708, %v707, %v617
    %vm710 = vcmask 56320
    %v711 = vsel %vm710, %v709, %v697
    %vm712 = vcmask 58368
    %v713 = vsel %vm712, %v711, -inf
    %714 = vmax.xlane.f32.xlu0 %v713
    %v715 = vpop.xlane.xlu0 %714
    %v716 = vsub.f32 %v711, %v715
    %v717 = vmul.f32 %v716, 1.442695
    %v718 = vpow.pop %v717
    %v719 = vsel %vm712, %v718, 0.0
    %720 = vadd.xlane.f32.xlu0 %v719
    %v721 = vpop.xlane.xlu0 %720
    %v722 = vrcp.pop %v721
    %v723 = vmul.f32 %v718, %v722
    %724 = vxpose.xlu0.b32.start [1/16] %v723, 128
    %725 = vxpose.xlu0.b32.cont [2/16] 0.0, 128
    %726 = vxpose.xlu0.b32.cont [3/16] 0.0, 128
    %727 = vxpose.xlu0.b32.cont [4/16] 0.0, 128
    %728 = vxpose.xlu0.b32.cont [5/16] 0.0, 128
    %729 = vxpose.xlu0.b32.cont [6/16] 0.0, 128
    %730 = vxpose.xlu0.b32.cont [7/16] 0.0, 128
    %731 = vxpose.xlu0.b32.cont [8/16] 0.0, 128
    %732 = vxpose.xlu0.b32.cont [9/16] 0.0, 128
    %733 = vxpose.xlu0.b32.cont [10/16] 0.0, 128
    %734 = vxpose.xlu0.b32.cont [11/16] 0.0, 128
    %735 = vxpose.xlu0.b32.cont [12/16] 0.0, 128
    %736 = vxpose.xlu0.b32.cont [13/16] 0.0, 128
    %737 = vxpose.xlu0.b32.cont [14/16] 0.0, 128
    %738 = vxpose.xlu0.b32.cont [15/16] 0.0, 128
    %739 = vxpose.xlu0.b32.end [16/16] 0.0, 128
    %v740 = vpop.trf.xlu0
    %v741 = vpop.trf.xlu0
    %v742 = vpop.trf.xlu0
    %v743 = vpop.trf.xlu0
    %v744 = vpop.trf.xlu0
    %v745 = vpop.trf.xlu0
    %v746 = vpop.trf.xlu0
    %v747 = vpop.trf.xlu0
    %v748 = vpop.trf.xlu0
    %v749 = vpop.trf.xlu0
    %v750 = vpop.trf.xlu0
    %v751 = vpop.trf.xlu0
    %v752 = vpop.trf.xlu0
    %v753 = vpop.trf.xlu0
    %v754 = vpop.trf.xlu0
    %v755 = vpop.trf.xlu0
    %756 = vst.msk [vmem:[%s4] sm:$0xff] %vm700, %v740
    // Predicated region
    $region26: #{tpu_custom_call.1} parent=1 // pred_check
      _
    $region27: #{tpu_custom_call.1} parent=1 // pred_check_branch
      %758 = sbr.rel (0) target = $region29
    $region28: #{tpu_custom_call.1} parent=1 // pred_region
      _
    $region29: #{tpu_custom_call.1} parent=1 // pred_fallthru
      _
    // Predicated region
    $region30: #{tpu_custom_call.1} parent=1 // pred_check
      _
    $region31: #{tpu_custom_call.1} parent=1 // pred_check_branch
      %760 = sbr.rel (0) target = $region33
    $region32: #{tpu_custom_call.1} parent=1 // pred_region
      _
    $region33: #{tpu_custom_call.1} parent=1 // pred_fallthru
      _
    %761 = vsyncpa [#allocation3], 1
    %762 = vsyncpa [#allocation5], 1

</llo_original>
